<compile_context>
chip_gen: v6e
topology: v6e:2x2x1
jax: 0.10.0
libtpu: 0.0.40
codegen_flags: <defaults>
</compile_context>

<pallas_src>
import functools

import jax
import jax.numpy as jnp
from jax.experimental import pallas as pl
from jax.experimental.pallas import tpu as pltpu


# ---------------------------------------------------------------------------
# Lanczos lgamma (g = 7, n = 9) in rational form: one divide, two logs.
# ---------------------------------------------------------------------------
_LANCZOS_G = 7.0
_LANCZOS_C = (
    0.99999999999980993,
    676.5203681218851,
    -1259.1392167224028,
    771.32342877765313,
    -176.61502916214059,
    12.507343278686905,
    -0.13857109526572012,
    9.9843695780195716e-6,
    1.5056327351493116e-7,
)
_HALF_LOG_2PI = 0.9189385332046727


def _lanczos_lgamma(x):
    """log Gamma(x) for x >= 1. Series sum(c_i/(z+i)) folded into num/den."""
    z = x - 1.0
    terms = [z + float(i) for i in range(1, 9)]           # z+1 .. z+8
    # prefix / suffix products (pure VPU multiplies)
    pre = [terms[0]]
    for k in range(1, 8):
        pre.append(pre[-1] * terms[k])
    suf = [None] * 8
    suf[7] = terms[7]
    for k in range(6, -1, -1):
        suf[k] = suf[k + 1] * terms[k]
    den = pre[7]                                          # prod_{i=1..8}(z+i)
    num = _LANCZOS_C[0] * den
    for i in range(8):
        if i == 0:
            pe = suf[1]
        elif i == 7:
            pe = pre[6]
        else:
            pe = pre[i - 1] * suf[i + 1]
        num = num + _LANCZOS_C[i + 1] * pe
    a = num / den                                         # 1 EUP divide (was 8)
    t = z + _LANCZOS_G + 0.5
    return _HALF_LOG_2PI + (z + 0.5) * jnp.log(t) - t + jnp.log(a)


def _lgamma_pos(x, logx):
    """log Gamma(x) for x > 0. `logx` = precomputed log(x) (reused for x<1)."""
    small = x < 1.0
    xs = jnp.where(small, x + 1.0, x)
    lg = _lanczos_lgamma(xs)
    return jnp.where(small, lg - logx, lg)                # lgamma(x)=lgamma(x+1)-log(x)


# ---------------------------------------------------------------------------
# Kernel: per-tile elementwise NB log-likelihood + nan->inf, accumulated into
# a per-`p` (1, 8, D) float32 output block with VPU adds only.
# ---------------------------------------------------------------------------
def _nbloss_kernel(yhat_ref, y_ref, out_ref, *, d, n, tm, T, eps, need_mask):
    p = pl.program_id(0)
    t = pl.program_id(1)

    @pl.when(t == 0)
    def _():
        out_ref[...] = jnp.zeros_like(out_ref)

    mu = yhat_ref[:, 0:d].astype(jnp.float32)
    theta = yhat_ref[:, d:2 * d].astype(jnp.float32)
    y = y_ref[...].astype(jnp.float32)

    te = theta + eps
    lt = jnp.log(te)
    yte = y + te
    l_yte = jnp.log(yte)

    lg_te = _lgamma_pos(te, lt)
    lg_y1 = _lanczos_lgamma(y + 1.0)          # y >= 0  ->  argument >= 1
    lg_yte = _lgamma_pos(yte, l_yte)

    t1 = lg_te + lg_y1 - lg_yte
    # (theta+y)*log(1 + mu/te) == (theta+y)*(log(mu+te) - log(te))
    t2 = (theta + y) * (jnp.log(mu + te) - lt) + y * (lt - jnp.log(mu + eps))
    final = t1 + t2
    final = jnp.where(jnp.isnan(final), jnp.inf, final)   # _nan2inf

    if need_mask:
        row_start = (p * T + t) * tm
        rows = row_start + jax.lax.broadcasted_iota(jnp.int32, (tm, 1), 0)
        final = jnp.where(rows < n, final, 0.0)

    # Fold row-groups of 8 into the (8, d) accumulator: pure VPU adds.
    contrib = jnp.sum(final.reshape(tm // 8, 8, d), axis=0)
    out_ref[0] += contrib


def _round_up(x, m):
    return ((x + m - 1) // m) * m


def nb_loss(yhat, y, eps=1e-8, tm=1024):
    """Pallas implementation of NBLoss.forward(yhat, y, eps)."""
    n, two_d = yhat.shape
    d = two_d // 2
    assert y.shape == (n, d)

    # Tile sizing: keep the double-buffered working set well under the scoped
    # VMEM default on every generation (v5e 16 MiB, v6e/v7x 32 MiB).
    bytes_per_row = 2 * d * yhat.dtype.itemsize + d * y.dtype.itemsize
    budget = 12 * 1024 * 1024
    tm_fit = max(8, budget // (2 * bytes_per_row))
    tm_eff = min(int(tm), int(tm_fit), _round_up(n, 8))
    tm_eff = max(8, (tm_eff // 8) * 8)

    total_tiles = pl.cdiv(n, tm_eff)
    P = 2                                   # second TensorCore on v7x
    T = pl.cdiv(total_tiles, P)
    need_mask = (P * T * tm_eff != n)

    def row_block(p, t):
        # Clamp so duplicated/out-of-range tiles re-read a valid block; their
        # contribution is masked out inside the kernel.
        return jnp.minimum(p * T + t, total_tiles - 1)

    kernel = functools.partial(
        _nbloss_kernel, d=d, n=n, tm=tm_eff, T=T, eps=float(eps),
        need_mask=need_mask,
    )

    partials = pl.pallas_call(
        kernel,
        out_shape=jax.ShapeDtypeStruct((P, 8, d), jnp.float32),
        grid_spec=pltpu.PrefetchScalarGridSpec(
            num_scalar_prefetch=0,
            grid=(P, T),
            in_specs=[
                pl.BlockSpec((tm_eff, 2 * d), lambda p, t: (row_block(p, t), 0)),
                pl.BlockSpec((tm_eff, d), lambda p, t: (row_block(p, t), 0)),
            ],
            out_specs=pl.BlockSpec((1, 8, d), lambda p, t: (p, 0, 0)),
        ),
        compiler_params=pltpu.CompilerParams(
            dimension_semantics=("parallel", "arbitrary"),
        ),
    )(yhat, y)

    return jnp.sum(partials) / jnp.float32(n * d)


# ---------------------------------------------------------------------------
# Pure-JAX reference (mirrors the PyTorch forward) for a sanity check.
# ---------------------------------------------------------------------------
def nb_loss_ref(yhat, y, eps=1e-8):
    d = yhat.shape[1] // 2
    mu = yhat[:, :d]
    theta = yhat[:, d:]
    t1 = (
        jax.lax.lgamma(theta + eps)
        + jax.lax.lgamma(y + 1.0)
        - jax.lax.lgamma(y + theta + eps)
    )
    t2 = (theta + y) * jnp.log(1.0 + mu / (theta + eps)) + y * (
        jnp.log(theta + eps) - jnp.log(mu + eps)
    )
    final = t1 + t2
    final = jnp.where(jnp.isnan(final), jnp.inf, final)
    return jnp.mean(final)


def _make_inputs(key, n, d):
    k_mu, k_theta, k_y = jax.random.split(key, 3)
    mu = jax.nn.softplus(jax.random.normal(k_mu, (n, d), jnp.float32)) + 1e-3
    theta = jax.nn.softplus(jax.random.normal(k_theta, (n, d), jnp.float32)) + 1e-3
    y = jnp.floor(
        jax.random.uniform(k_y, (n, d), jnp.float32, minval=0.0, maxval=20.0)
    )
    yhat = jnp.concatenate([mu, theta], axis=1)  # (n, 2*d)
    return yhat, y


if __name__ == "__main__":
    key = jax.random.PRNGKey(0)
    k_a, k_b = jax.random.split(key, 2)

    # Case A: ragged rows (masked partial tile + clamped duplicate tile).
    yhat_a, y_a = _make_inputs(k_a, 40, 128)
    loss_a = jax.block_until_ready(nb_loss(yhat_a, y_a, tm=16))
    ref_a = jax.block_until_ready(nb_loss_ref(yhat_a, y_a))
    assert jnp.isfinite(loss_a), f"non-finite loss: {loss_a}"
    assert jnp.allclose(loss_a, ref_a, rtol=5e-3, atol=5e-3), (loss_a, ref_a)

    # Case B: evenly divided rows (no masking path).
    yhat_b, y_b = _make_inputs(k_b, 64, 128)
    loss_b = jax.block_until_ready(nb_loss(yhat_b, y_b, tm=32))
    ref_b = jax.block_until_ready(nb_loss_ref(yhat_b, y_b))
    assert jnp.isfinite(loss_b), f"non-finite loss: {loss_b}"
    assert jnp.allclose(loss_b, ref_b, rtol=5e-3, atol=5e-3), (loss_b, ref_b)

    print("KERNEL_OK")
</pallas_src>

<mosaic_0001>
module attributes {stable_mosaic.version = 11 : i64} {
  func.func @_nbloss_kernel(%arg0: i32, %arg1: i32, %arg2: memref<16x256xf32, #tpu.memory_space<vmem>>, %arg3: memref<16x128xf32, #tpu.memory_space<vmem>>, %arg4: memref<1x8x128xf32, #tpu.memory_space<vmem>>) attributes {dimension_semantics = [#tpu.dimension_semantics<parallel>, #tpu.dimension_semantics<arbitrary>], iteration_bounds = array<i64: 2, 2>, scalar_prefetch = 0 : i64, scratch_operands = 0 : i64, tpu.core_type = #tpu.core_type<tc>, window_params = [{transform_indices = @transform_0, window_bounds = array<i64: 16, 256>}, {transform_indices = @transform_1, window_bounds = array<i64: 16, 128>}, {transform_indices = @transform_2, window_bounds = array<i64: 1, 8, 128>}]} {
    %c0_i32 = arith.constant 0 : i32
    %0 = arith.cmpi eq, %arg1, %c0_i32 : i32
    %1 = arith.extui %0 : i1 to i32
    %c0_i32_0 = arith.constant 0 : i32
    %2 = arith.cmpi ne, %1, %c0_i32_0 : i32
    scf.if %2 {
      %cst_86 = arith.constant 0.000000e+00 : f32
      %295 = vector.broadcast %cst_86 : f32 to vector<1x8x128xf32>
      %c0_87 = arith.constant 0 : index
      %c0_88 = arith.constant 0 : index
      %c0_89 = arith.constant 0 : index
      %296 = vector.load %arg4[%c0_87, %c0_88, %c0_89] : memref<1x8x128xf32, #tpu.memory_space<vmem>>, vector<1x8x128xf32>
      tpu.vector_store %arg4[%c0_87, %c0_88, %c0_89], %295 {strides = array<i32>} : memref<1x8x128xf32, #tpu.memory_space<vmem>>, vector<1x8x128xf32>,
    } else {
    }
    %c0 = arith.constant 0 : index
    %c0_1 = arith.constant 0 : index
    %3 = vector.load %arg2[%c0, %c0_1] : memref<16x256xf32, #tpu.memory_space<vmem>>, vector<16x128xf32>
    %c0_2 = arith.constant 0 : index
    %c128 = arith.constant 128 : index
    %4 = vector.load %arg2[%c0_2, %c128] : memref<16x256xf32, #tpu.memory_space<vmem>>, vector<16x128xf32>
    %c0_3 = arith.constant 0 : index
    %c0_4 = arith.constant 0 : index
    %5 = vector.load %arg3[%c0_3, %c0_4] : memref<16x128xf32, #tpu.memory_space<vmem>>, vector<16x128xf32>
    %cst = arith.constant 9.99999993E-9 : f32
    %6 = vector.broadcast %cst : f32 to vector<16x128xf32>
    %7 = arith.addf %4, %6 : vector<16x128xf32>
    %8 = math.log %7 : vector<16x128xf32>
    %9 = arith.addf %5, %7 : vector<16x128xf32>
    %10 = math.log %9 : vector<16x128xf32>
    %cst_5 = arith.constant 1.000000e+00 : f32
    %11 = vector.broadcast %cst_5 : f32 to vector<16x128xf32>
    %12 = arith.cmpf olt, %7, %11 : vector<16x128xf32>
    %cst_6 = arith.constant 1.000000e+00 : f32
    %13 = vector.broadcast %cst_6 : f32 to vector<16x128xf32>
    %14 = arith.addf %7, %13 : vector<16x128xf32>
    %15 = arith.select %12, %14, %7 : vector<16x128xi1>, vector<16x128xf32>
    %cst_7 = arith.constant 1.000000e+00 : f32
    %16 = vector.broadcast %cst_7 : f32 to vector<16x128xf32>
    %17 = arith.subf %15, %16 : vector<16x128xf32>
    %cst_8 = arith.constant 1.000000e+00 : f32
    %18 = vector.broadcast %cst_8 : f32 to vector<16x128xf32>
    %19 = arith.addf %17, %18 : vector<16x128xf32>
    %cst_9 = arith.constant 2.000000e+00 : f32
    %20 = vector.broadcast %cst_9 : f32 to vector<16x128xf32>
    %21 = arith.addf %17, %20 : vector<16x128xf32>
    %cst_10 = arith.constant 3.000000e+00 : f32
    %22 = vector.broadcast %cst_10 : f32 to vector<16x128xf32>
    %23 = arith.addf %17, %22 : vector<16x128xf32>
    %cst_11 = arith.constant 4.000000e+00 : f32
    %24 = vector.broadcast %cst_11 : f32 to vector<16x128xf32>
    %25 = arith.addf %17, %24 : vector<16x128xf32>
    %cst_12 = arith.constant 5.000000e+00 : f32
    %26 = vector.broadcast %cst_12 : f32 to vector<16x128xf32>
    %27 = arith.addf %17, %26 : vector<16x128xf32>
    %cst_13 = arith.constant 6.000000e+00 : f32
    %28 = vector.broadcast %cst_13 : f32 to vector<16x128xf32>
    %29 = arith.addf %17, %28 : vector<16x128xf32>
    %cst_14 = arith.constant 7.000000e+00 : f32
    %30 = vector.broadcast %cst_14 : f32 to vector<16x128xf32>
    %31 = arith.addf %17, %30 : vector<16x128xf32>
    %cst_15 = arith.constant 8.000000e+00 : f32
    %32 = vector.broadcast %cst_15 : f32 to vector<16x128xf32>
    %33 = arith.addf %17, %32 : vector<16x128xf32>
    %34 = arith.mulf %19, %21 : vector<16x128xf32>
    %35 = arith.mulf %34, %23 : vector<16x128xf32>
    %36 = arith.mulf %35, %25 : vector<16x128xf32>
    %37 = arith.mulf %36, %27 : vector<16x128xf32>
    %38 = arith.mulf %37, %29 : vector<16x128xf32>
    %39 = arith.mulf %38, %31 : vector<16x128xf32>
    %40 = arith.mulf %39, %33 : vector<16x128xf32>
    %41 = arith.mulf %33, %31 : vector<16x128xf32>
    %42 = arith.mulf %41, %29 : vector<16x128xf32>
    %43 = arith.mulf %42, %27 : vector<16x128xf32>
    %44 = arith.mulf %43, %25 : vector<16x128xf32>
    %45 = arith.mulf %44, %23 : vector<16x128xf32>
    %46 = arith.mulf %45, %21 : vector<16x128xf32>
    %cst_16 = arith.constant 1.000000e+00 : f32
    %47 = vector.broadcast %cst_16 : f32 to vector<16x128xf32>
    %48 = arith.mulf %47, %40 : vector<16x128xf32>
    %cst_17 = arith.constant 676.520386 : f32
    %49 = vector.broadcast %cst_17 : f32 to vector<16x128xf32>
    %50 = arith.mulf %49, %46 : vector<16x128xf32>
    %51 = arith.addf %48, %50 : vector<16x128xf32>
    %52 = arith.mulf %19, %45 : vector<16x128xf32>
    %cst_18 = arith.constant -1259.13916 : f32
    %53 = vector.broadcast %cst_18 : f32 to vector<16x128xf32>
    %54 = arith.mulf %53, %52 : vector<16x128xf32>
    %55 = arith.addf %51, %54 : vector<16x128xf32>
    %56 = arith.mulf %34, %44 : vector<16x128xf32>
    %cst_19 = arith.constant 771.323425 : f32
    %57 = vector.broadcast %cst_19 : f32 to vector<16x128xf32>
    %58 = arith.mulf %57, %56 : vector<16x128xf32>
    %59 = arith.addf %55, %58 : vector<16x128xf32>
    %60 = arith.mulf %35, %43 : vector<16x128xf32>
    %cst_20 = arith.constant -176.615036 : f32
    %61 = vector.broadcast %cst_20 : f32 to vector<16x128xf32>
    %62 = arith.mulf %61, %60 : vector<16x128xf32>
    %63 = arith.addf %59, %62 : vector<16x128xf32>
    %64 = arith.mulf %36, %42 : vector<16x128xf32>
    %cst_21 = arith.constant 12.5073433 : f32
    %65 = vector.broadcast %cst_21 : f32 to vector<16x128xf32>
    %66 = arith.mulf %65, %64 : vector<16x128xf32>
    %67 = arith.addf %63, %66 : vector<16x128xf32>
    %68 = arith.mulf %37, %41 : vector<16x128xf32>
    %cst_22 = arith.constant -0.138571098 : f32
    %69 = vector.broadcast %cst_22 : f32 to vector<16x128xf32>
    %70 = arith.mulf %69, %68 : vector<16x128xf32>
    %71 = arith.addf %67, %70 : vector<16x128xf32>
    %72 = arith.mulf %38, %33 : vector<16x128xf32>
    %cst_23 = arith.constant 9.98436917E-6 : f32
    %73 = vector.broadcast %cst_23 : f32 to vector<16x128xf32>
    %74 = arith.mulf %73, %72 : vector<16x128xf32>
    %75 = arith.addf %71, %74 : vector<16x128xf32>
    %cst_24 = arith.constant 1.50563267E-7 : f32
    %76 = vector.broadcast %cst_24 : f32 to vector<16x128xf32>
    %77 = arith.mulf %76, %39 : vector<16x128xf32>
    %78 = arith.addf %75, %77 : vector<16x128xf32>
    %79 = arith.divf %78, %40 : vector<16x128xf32>
    %cst_25 = arith.constant 7.000000e+00 : f32
    %80 = vector.broadcast %cst_25 : f32 to vector<16x128xf32>
    %81 = arith.addf %17, %80 : vector<16x128xf32>
    %cst_26 = arith.constant 5.000000e-01 : f32
    %82 = vector.broadcast %cst_26 : f32 to vector<16x128xf32>
    %83 = arith.addf %81, %82 : vector<16x128xf32>
    %cst_27 = arith.constant 5.000000e-01 : f32
    %84 = vector.broadcast %cst_27 : f32 to vector<16x128xf32>
    %85 = arith.addf %17, %84 : vector<16x128xf32>
    %86 = math.log %83 : vector<16x128xf32>
    %87 = arith.mulf %85, %86 : vector<16x128xf32>
    %cst_28 = arith.constant 0.918938517 : f32
    %88 = vector.broadcast %cst_28 : f32 to vector<16x128xf32>
    %89 = arith.addf %88, %87 : vector<16x128xf32>
    %90 = arith.subf %89, %83 : vector<16x128xf32>
    %91 = math.log %79 : vector<16x128xf32>
    %92 = arith.addf %90, %91 : vector<16x128xf32>
    %93 = arith.subf %92, %8 : vector<16x128xf32>
    %94 = arith.select %12, %93, %92 : vector<16x128xi1>, vector<16x128xf32>
    %cst_29 = arith.constant 1.000000e+00 : f32
    %95 = vector.broadcast %cst_29 : f32 to vector<16x128xf32>
    %96 = arith.addf %5, %95 : vector<16x128xf32>
    %cst_30 = arith.constant 1.000000e+00 : f32
    %97 = vector.broadcast %cst_30 : f32 to vector<16x128xf32>
    %98 = arith.subf %96, %97 : vector<16x128xf32>
    %cst_31 = arith.constant 1.000000e+00 : f32
    %99 = vector.broadcast %cst_31 : f32 to vector<16x128xf32>
    %100 = arith.addf %98, %99 : vector<16x128xf32>
    %cst_32 = arith.constant 2.000000e+00 : f32
    %101 = vector.broadcast %cst_32 : f32 to vector<16x128xf32>
    %102 = arith.addf %98, %101 : vector<16x128xf32>
    %cst_33 = arith.constant 3.000000e+00 : f32
    %103 = vector.broadcast %cst_33 : f32 to vector<16x128xf32>
    %104 = arith.addf %98, %103 : vector<16x128xf32>
    %cst_34 = arith.constant 4.000000e+00 : f32
    %105 = vector.broadcast %cst_34 : f32 to vector<16x128xf32>
    %106 = arith.addf %98, %105 : vector<16x128xf32>
    %cst_35 = arith.constant 5.000000e+00 : f32
    %107 = vector.broadcast %cst_35 : f32 to vector<16x128xf32>
    %108 = arith.addf %98, %107 : vector<16x128xf32>
    %cst_36 = arith.constant 6.000000e+00 : f32
    %109 = vector.broadcast %cst_36 : f32 to vector<16x128xf32>
    %110 = arith.addf %98, %109 : vector<16x128xf32>
    %cst_37 = arith.constant 7.000000e+00 : f32
    %111 = vector.broadcast %cst_37 : f32 to vector<16x128xf32>
    %112 = arith.addf %98, %111 : vector<16x128xf32>
    %cst_38 = arith.constant 8.000000e+00 : f32
    %113 = vector.broadcast %cst_38 : f32 to vector<16x128xf32>
    %114 = arith.addf %98, %113 : vector<16x128xf32>
    %115 = arith.mulf %100, %102 : vector<16x128xf32>
    %116 = arith.mulf %115, %104 : vector<16x128xf32>
    %117 = arith.mulf %116, %106 : vector<16x128xf32>
    %118 = arith.mulf %117, %108 : vector<16x128xf32>
    %119 = arith.mulf %118, %110 : vector<16x128xf32>
    %120 = arith.mulf %119, %112 : vector<16x128xf32>
    %121 = arith.mulf %120, %114 : vector<16x128xf32>
    %122 = arith.mulf %114, %112 : vector<16x128xf32>
    %123 = arith.mulf %122, %110 : vector<16x128xf32>
    %124 = arith.mulf %123, %108 : vector<16x128xf32>
    %125 = arith.mulf %124, %106 : vector<16x128xf32>
    %126 = arith.mulf %125, %104 : vector<16x128xf32>
    %127 = arith.mulf %126, %102 : vector<16x128xf32>
    %cst_39 = arith.constant 1.000000e+00 : f32
    %128 = vector.broadcast %cst_39 : f32 to vector<16x128xf32>
    %129 = arith.mulf %128, %121 : vector<16x128xf32>
    %cst_40 = arith.constant 676.520386 : f32
    %130 = vector.broadcast %cst_40 : f32 to vector<16x128xf32>
    %131 = arith.mulf %130, %127 : vector<16x128xf32>
    %132 = arith.addf %129, %131 : vector<16x128xf32>
    %133 = arith.mulf %100, %126 : vector<16x128xf32>
    %cst_41 = arith.constant -1259.13916 : f32
    %134 = vector.broadcast %cst_41 : f32 to vector<16x128xf32>
    %135 = arith.mulf %134, %133 : vector<16x128xf32>
    %136 = arith.addf %132, %135 : vector<16x128xf32>
    %137 = arith.mulf %115, %125 : vector<16x128xf32>
    %cst_42 = arith.constant 771.323425 : f32
    %138 = vector.broadcast %cst_42 : f32 to vector<16x128xf32>
    %139 = arith.mulf %138, %137 : vector<16x128xf32>
    %140 = arith.addf %136, %139 : vector<16x128xf32>
    %141 = arith.mulf %116, %124 : vector<16x128xf32>
    %cst_43 = arith.constant -176.615036 : f32
    %142 = vector.broadcast %cst_43 : f32 to vector<16x128xf32>
    %143 = arith.mulf %142, %141 : vector<16x128xf32>
    %144 = arith.addf %140, %143 : vector<16x128xf32>
    %145 = arith.mulf %117, %123 : vector<16x128xf32>
    %cst_44 = arith.constant 12.5073433 : f32
    %146 = vector.broadcast %cst_44 : f32 to vector<16x128xf32>
    %147 = arith.mulf %146, %145 : vector<16x128xf32>
    %148 = arith.addf %144, %147 : vector<16x128xf32>
    %149 = arith.mulf %118, %122 : vector<16x128xf32>
    %cst_45 = arith.constant -0.138571098 : f32
    %150 = vector.broadcast %cst_45 : f32 to vector<16x128xf32>
    %151 = arith.mulf %150, %149 : vector<16x128xf32>
    %152 = arith.addf %148, %151 : vector<16x128xf32>
    %153 = arith.mulf %119, %114 : vector<16x128xf32>
    %cst_46 = arith.constant 9.98436917E-6 : f32
    %154 = vector.broadcast %cst_46 : f32 to vector<16x128xf32>
    %155 = arith.mulf %154, %153 : vector<16x128xf32>
    %156 = arith.addf %152, %155 : vector<16x128xf32>
    %cst_47 = arith.constant 1.50563267E-7 : f32
    %157 = vector.broadcast %cst_47 : f32 to vector<16x128xf32>
    %158 = arith.mulf %157, %120 : vector<16x128xf32>
    %159 = arith.addf %156, %158 : vector<16x128xf32>
    %160 = arith.divf %159, %121 : vector<16x128xf32>
    %cst_48 = arith.constant 7.000000e+00 : f32
    %161 = vector.broadcast %cst_48 : f32 to vector<16x128xf32>
    %162 = arith.addf %98, %161 : vector<16x128xf32>
    %cst_49 = arith.constant 5.000000e-01 : f32
    %163 = vector.broadcast %cst_49 : f32 to vector<16x128xf32>
    %164 = arith.addf %162, %163 : vector<16x128xf32>
    %cst_50 = arith.constant 5.000000e-01 : f32
    %165 = vector.broadcast %cst_50 : f32 to vector<16x128xf32>
    %166 = arith.addf %98, %165 : vector<16x128xf32>
    %167 = math.log %164 : vector<16x128xf32>
    %168 = arith.mulf %166, %167 : vector<16x128xf32>
    %cst_51 = arith.constant 0.918938517 : f32
    %169 = vector.broadcast %cst_51 : f32 to vector<16x128xf32>
    %170 = arith.addf %169, %168 : vector<16x128xf32>
    %171 = arith.subf %170, %164 : vector<16x128xf32>
    %172 = math.log %160 : vector<16x128xf32>
    %173 = arith.addf %171, %172 : vector<16x128xf32>
    %cst_52 = arith.constant 1.000000e+00 : f32
    %174 = vector.broadcast %cst_52 : f32 to vector<16x128xf32>
    %175 = arith.cmpf olt, %9, %174 : vector<16x128xf32>
    %cst_53 = arith.constant 1.000000e+00 : f32
    %176 = vector.broadcast %cst_53 : f32 to vector<16x128xf32>
    %177 = arith.addf %9, %176 : vector<16x128xf32>
    %178 = arith.select %175, %177, %9 : vector<16x128xi1>, vector<16x128xf32>
    %cst_54 = arith.constant 1.000000e+00 : f32
    %179 = vector.broadcast %cst_54 : f32 to vector<16x128xf32>
    %180 = arith.subf %178, %179 : vector<16x128xf32>
    %cst_55 = arith.constant 1.000000e+00 : f32
    %181 = vector.broadcast %cst_55 : f32 to vector<16x128xf32>
    %182 = arith.addf %180, %181 : vector<16x128xf32>
    %cst_56 = arith.constant 2.000000e+00 : f32
    %183 = vector.broadcast %cst_56 : f32 to vector<16x128xf32>
    %184 = arith.addf %180, %183 : vector<16x128xf32>
    %cst_57 = arith.constant 3.000000e+00 : f32
    %185 = vector.broadcast %cst_57 : f32 to vector<16x128xf32>
    %186 = arith.addf %180, %185 : vector<16x128xf32>
    %cst_58 = arith.constant 4.000000e+00 : f32
    %187 = vector.broadcast %cst_58 : f32 to vector<16x128xf32>
    %188 = arith.addf %180, %187 : vector<16x128xf32>
    %cst_59 = arith.constant 5.000000e+00 : f32
    %189 = vector.broadcast %cst_59 : f32 to vector<16x128xf32>
    %190 = arith.addf %180, %189 : vector<16x128xf32>
    %cst_60 = arith.constant 6.000000e+00 : f32
    %191 = vector.broadcast %cst_60 : f32 to vector<16x128xf32>
    %192 = arith.addf %180, %191 : vector<16x128xf32>
    %cst_61 = arith.constant 7.000000e+00 : f32
    %193 = vector.broadcast %cst_61 : f32 to vector<16x128xf32>
    %194 = arith.addf %180, %193 : vector<16x128xf32>
    %cst_62 = arith.constant 8.000000e+00 : f32
    %195 = vector.broadcast %cst_62 : f32 to vector<16x128xf32>
    %196 = arith.addf %180, %195 : vector<16x128xf32>
    %197 = arith.mulf %182, %184 : vector<16x128xf32>
    %198 = arith.mulf %197, %186 : vector<16x128xf32>
    %199 = arith.mulf %198, %188 : vector<16x128xf32>
    %200 = arith.mulf %199, %190 : vector<16x128xf32>
    %201 = arith.mulf %200, %192 : vector<16x128xf32>
    %202 = arith.mulf %201, %194 : vector<16x128xf32>
    %203 = arith.mulf %202, %196 : vector<16x128xf32>
    %204 = arith.mulf %196, %194 : vector<16x128xf32>
    %205 = arith.mulf %204, %192 : vector<16x128xf32>
    %206 = arith.mulf %205, %190 : vector<16x128xf32>
    %207 = arith.mulf %206, %188 : vector<16x128xf32>
    %208 = arith.mulf %207, %186 : vector<16x128xf32>
    %209 = arith.mulf %208, %184 : vector<16x128xf32>
    %cst_63 = arith.constant 1.000000e+00 : f32
    %210 = vector.broadcast %cst_63 : f32 to vector<16x128xf32>
    %211 = arith.mulf %210, %203 : vector<16x128xf32>
    %cst_64 = arith.constant 676.520386 : f32
    %212 = vector.broadcast %cst_64 : f32 to vector<16x128xf32>
    %213 = arith.mulf %212, %209 : vector<16x128xf32>
    %214 = arith.addf %211, %213 : vector<16x128xf32>
    %215 = arith.mulf %182, %208 : vector<16x128xf32>
    %cst_65 = arith.constant -1259.13916 : f32
    %216 = vector.broadcast %cst_65 : f32 to vector<16x128xf32>
    %217 = arith.mulf %216, %215 : vector<16x128xf32>
    %218 = arith.addf %214, %217 : vector<16x128xf32>
    %219 = arith.mulf %197, %207 : vector<16x128xf32>
    %cst_66 = arith.constant 771.323425 : f32
    %220 = vector.broadcast %cst_66 : f32 to vector<16x128xf32>
    %221 = arith.mulf %220, %219 : vector<16x128xf32>
    %222 = arith.addf %218, %221 : vector<16x128xf32>
    %223 = arith.mulf %198, %206 : vector<16x128xf32>
    %cst_67 = arith.constant -176.615036 : f32
    %224 = vector.broadcast %cst_67 : f32 to vector<16x128xf32>
    %225 = arith.mulf %224, %223 : vector<16x128xf32>
    %226 = arith.addf %222, %225 : vector<16x128xf32>
    %227 = arith.mulf %199, %205 : vector<16x128xf32>
    %cst_68 = arith.constant 12.5073433 : f32
    %228 = vector.broadcast %cst_68 : f32 to vector<16x128xf32>
    %229 = arith.mulf %228, %227 : vector<16x128xf32>
    %230 = arith.addf %226, %229 : vector<16x128xf32>
    %231 = arith.mulf %200, %204 : vector<16x128xf32>
    %cst_69 = arith.constant -0.138571098 : f32
    %232 = vector.broadcast %cst_69 : f32 to vector<16x128xf32>
    %233 = arith.mulf %232, %231 : vector<16x128xf32>
    %234 = arith.addf %230, %233 : vector<16x128xf32>
    %235 = arith.mulf %201, %196 : vector<16x128xf32>
    %cst_70 = arith.constant 9.98436917E-6 : f32
    %236 = vector.broadcast %cst_70 : f32 to vector<16x128xf32>
    %237 = arith.mulf %236, %235 : vector<16x128xf32>
    %238 = arith.addf %234, %237 : vector<16x128xf32>
    %cst_71 = arith.constant 1.50563267E-7 : f32
    %239 = vector.broadcast %cst_71 : f32 to vector<16x128xf32>
    %240 = arith.mulf %239, %202 : vector<16x128xf32>
    %241 = arith.addf %238, %240 : vector<16x128xf32>
    %242 = arith.divf %241, %203 : vector<16x128xf32>
    %cst_72 = arith.constant 7.000000e+00 : f32
    %243 = vector.broadcast %cst_72 : f32 to vector<16x128xf32>
    %244 = arith.addf %180, %243 : vector<16x128xf32>
    %cst_73 = arith.constant 5.000000e-01 : f32
    %245 = vector.broadcast %cst_73 : f32 to vector<16x128xf32>
    %246 = arith.addf %244, %245 : vector<16x128xf32>
    %cst_74 = arith.constant 5.000000e-01 : f32
    %247 = vector.broadcast %cst_74 : f32 to vector<16x128xf32>
    %248 = arith.addf %180, %247 : vector<16x128xf32>
    %249 = math.log %246 : vector<16x128xf32>
    %250 = arith.mulf %248, %249 : vector<16x128xf32>
    %cst_75 = arith.constant 0.918938517 : f32
    %251 = vector.broadcast %cst_75 : f32 to vector<16x128xf32>
    %252 = arith.addf %251, %250 : vector<16x128xf32>
    %253 = arith.subf %252, %246 : vector<16x128xf32>
    %254 = math.log %242 : vector<16x128xf32>
    %255 = arith.addf %253, %254 : vector<16x128xf32>
    %256 = arith.subf %255, %10 : vector<16x128xf32>
    %257 = arith.select %175, %256, %255 : vector<16x128xi1>, vector<16x128xf32>
    %258 = arith.addf %94, %173 : vector<16x128xf32>
    %259 = arith.subf %258, %257 : vector<16x128xf32>
    %260 = arith.addf %4, %5 : vector<16x128xf32>
    %261 = arith.addf %3, %7 : vector<16x128xf32>
    %262 = math.log %261 : vector<16x128xf32>
    %263 = arith.subf %262, %8 : vector<16x128xf32>
    %264 = arith.mulf %260, %263 : vector<16x128xf32>
    %cst_76 = arith.constant 9.99999993E-9 : f32
    %265 = vector.broadcast %cst_76 : f32 to vector<16x128xf32>
    %266 = arith.addf %3, %265 : vector<16x128xf32>
    %267 = math.log %266 : vector<16x128xf32>
    %268 = arith.subf %8, %267 : vector<16x128xf32>
    %269 = arith.mulf %5, %268 : vector<16x128xf32>
    %270 = arith.addf %264, %269 : vector<16x128xf32>
    %271 = arith.addf %259, %270 : vector<16x128xf32>
    %272 = arith.cmpf one, %271, %271 : vector<16x128xf32>
    %cst_77 = arith.constant 0x7F800000 : f32
    %273 = vector.broadcast %cst_77 : f32 to vector<16x128xf32>
    %274 = arith.select %272, %273, %271 : vector<16x128xi1>, vector<16x128xf32>
    %c2_i32 = arith.constant 2 : i32
    %275 = arith.muli %arg0, %c2_i32 : i32
    %276 = arith.addi %275, %arg1 : i32
    %c16_i32 = arith.constant 16 : i32
    %277 = arith.muli %276, %c16_i32 : i32
    %278 = tpu.iota {dimensions = array<i32: 0>} : vector<16x1xi32>
    %279 = vector.broadcast %277 : i32 to vector<16x1xi32>
    %280 = arith.addi %279, %278 : vector<16x1xi32>
    %c40_i32 = arith.constant 40 : i32
    %281 = vector.broadcast %c40_i32 : i32 to vector<16x1xi32>
    %282 = arith.cmpi slt, %280, %281 : vector<16x1xi32>
    %cst_78 = arith.constant 0.000000e+00 : f32
    %283 = vector.shape_cast %282 : vector<16x1xi1> to vector<16x1xi1>
    %284 = vector.broadcast %283 : vector<16x1xi1> to vector<16x128xi1>
    %285 = vector.broadcast %cst_78 : f32 to vector<16x128xf32>
    %286 = arith.select %284, %274, %285 : vector<16x128xi1>, vector<16x128xf32>
    %287 = vector.shape_cast %286 : vector<16x128xf32> to vector<2x8x128xf32>
    %cst_79 = arith.constant dense<0.000000e+00> : vector<8x128xf32>
    %288 = vector.multi_reduction <add>, %287, %cst_79 [0] : vector<2x8x128xf32> to vector<8x128xf32>
    %c0_80 = arith.constant 0 : index
    %c0_81 = arith.constant 0 : index
    %c0_82 = arith.constant 0 : index
    %289 = vector.load %arg4[%c0_80, %c0_81, %c0_82] : memref<1x8x128xf32, #tpu.memory_space<vmem>>, vector<1x8x128xf32>
    %290 = vector.shape_cast %289 : vector<1x8x128xf32> to vector<8x128xf32>
    %291 = arith.addf %290, %288 : vector<8x128xf32>
    %c0_83 = arith.constant 0 : index
    %c0_84 = arith.constant 0 : index
    %c0_85 = arith.constant 0 : index
    %292 = vector.load %arg4[%c0_83, %c0_84, %c0_85] : memref<1x8x128xf32, #tpu.memory_space<vmem>>, vector<1x8x128xf32>
    %293 = vector.shape_cast %292 : vector<1x8x128xf32> to vector<8x128xf32>
    %294 = vector.shape_cast %291 : vector<8x128xf32> to vector<1x8x128xf32>
    tpu.vector_store %arg4[%c0_83, %c0_84, %c0_85], %294 {strides = array<i32>} : memref<1x8x128xf32, #tpu.memory_space<vmem>>, vector<1x8x128xf32>,
    return
  }
  func.func @transform_0(%arg0: i32, %arg1: i32) -> (i32, i32) {
    %c2_i32 = arith.constant 2 : i32
    %0 = arith.muli %arg0, %c2_i32 : i32
    %1 = arith.addi %0, %arg1 : i32
    %c2_i32_0 = arith.constant 2 : i32
    %2 = arith.minsi %1, %c2_i32_0 : i32
    %c0_i32 = arith.constant 0 : i32
    %c0_i32_1 = arith.constant 0 : i32
    return %2, %c0_i32 : i32, i32
  }
  func.func @transform_1(%arg0: i32, %arg1: i32) -> (i32, i32) {
    %c2_i32 = arith.constant 2 : i32
    %0 = arith.muli %arg0, %c2_i32 : i32
    %1 = arith.addi %0, %arg1 : i32
    %c2_i32_0 = arith.constant 2 : i32
    %2 = arith.minsi %1, %c2_i32_0 : i32
    %c0_i32 = arith.constant 0 : i32
    %c0_i32_1 = arith.constant 0 : i32
    return %2, %c0_i32 : i32, i32
  }
  func.func @transform_2(%arg0: i32, %arg1: i32) -> (i32, i32, i32) {
    %c0_i32 = arith.constant 0 : i32
    %c0_i32_0 = arith.constant 0 : i32
    %c0_i32_1 = arith.constant 0 : i32
    return %arg0, %c0_i32, %c0_i32_0 : i32, i32, i32
  }
}

</mosaic_0001>

<llo_original>
// kernel: tpu_custom_call.1
$region0: #{tpu_custom_call.1}
  #allocation0 [shape = 'u32[]', space=smem, size = 0x4, offset = 0x4, fixed_abs, tag = 'smem constant byte address 0x4 - core index']
  #allocation1 [shape = 'u32[144,128]{1,0:T(1,128)}', space=vmem, size = 0x12000, scoped, tag = 'internal scratch']
  %s0 = inlined_call_operand.hbm [shape: f32[40,256], index: 0, kind: input, shape index: {}]
  %s1 = inlined_call_operand.hbm [shape: f32[40,128], index: 1, kind: input, shape index: {}]
  %s2 = inlined_call_operand.hbm [shape: f32[2,8,128], index: 2, kind: output, shape index: {}]
  %s3 = sld [smem:[#allocation0]]
  $region53: #{tpu_custom_call.1} parent=0
    _
  %s5 = ssub.s32 1, %s3
  %s6 = scalar_select 0, %s5, %s3
  $region1: #{tpu_custom_call.1} parent=0
    #allocation2 [shape = 'u8[32768]{0}', space=vmem, size = 0x8000, scoped, tag = 'input window, operand 0']
    #allocation3 [shape = 's32[2]{0}', space=sflag, size = 0x8, scoped, tag = 'scoped memory for tpu_custom_call.1']
    #allocation4 [shape = 's32[2]{0}', space=sflag, size = 0x8, scoped, tag = 'scoped memory for tpu_custom_call.1']
    #allocation5 [shape = 'u8[16384]{0}', space=vmem, size = 0x4000, scoped, tag = 'input window, operand 1']
    #allocation6 [shape = 's32[2]{0}', space=sflag, size = 0x8, scoped, tag = 'scoped memory for tpu_custom_call.1']
    #allocation7 [shape = 'u8[8192]{0}', space=vmem, size = 0x2000, scoped, tag = 'output window, operand 0']
    %7 = vsyncpa [#allocation3], 0
    %s8 = scalar_lea.sflag [#allocation3], 1
    %9 = vsyncpa %s8, 0
    %10 = vsyncpa [#allocation6], 0
    %s11 = scalar_lea.sflag [#allocation6], 1
    %12 = vsyncpa %s11, 0
    %13 = vsyncpa [#allocation4], 0
    %s14 = scalar_lea.sflag [#allocation4], 1
    %15 = vsyncpa %s14, 0
    loop: start=0, step=1, limit=6
    $region2: #{tpu_custom_call.1} parent=1 // loop_pre_header
      _
    $region3: #{tpu_custom_call.1} parent=1 // loop_header
      %s17 = sphi 0, %s21
      %p18 = scmp.ge.s32.totalorder %s17, 6
      %s24 = sphi 0, %s36
      %s25 = sphi 0, %s32
      %s26 = sphi 0, %s24
      %s27 = sphi 0, %s25
      %s28 = sphi 0, %s26
      %s29 = sphi 0, %s27
      %s47 = sphi 0, %s49
      %s50 = sphi 0, %s47
      %s51 = sphi 0, %s50
      %s67 = sphi 0, %s51
      %s81 = sphi 0, %s83
      %s84 = sphi 0, %s81
      %s85 = sphi 0, %s84
      %s101 = sphi 0, %s85
      %s107 = sphi 0, %s109
      %s110 = sphi 0, %s107
      %s111 = sphi 0, %s110
      %s127 = sphi 0, %s111
    $region4: #{tpu_custom_call.1} parent=1 // loop_header_branch
      %20 = sbr.rel (%p18) target = $region8
    $region5: #{tpu_custom_call.1} parent=1 // loop_body
      %s22 = ssub.s32 %s17, 1
      %s23 = ssub.s32 %s17, 2
      %s30 = sadd.s32 1, %s25
      %p31 = scmp.ge.s32.totalorder %s30, 2
      %s32 = scalar_select %p31, 0, %s30
      %s33 = sadd.s32 1, %s24
      %s34 = scalar_select %p31, %s33, %s24
      %p35 = scmp.ge.s32.totalorder %s34, 2
      %s36 = scalar_select %p35, 0, %s34
      %s37 = smul.u32 %s24, 2
      %s38 = sadd.s32 %s37, %s25
      %p39 = scmp.lt.s32.totalorder %s38, 2
      %s40 = scalar_select %p39, %s38, 2
      %s41 = smul.u32 %s36, 2
      %s42 = sadd.s32 %s41, %s32
      %p43 = scmp.lt.s32.totalorder %s42, 2
      %s44 = scalar_select %p43, %s42, 2
      %s45 = ssub.s32 %s40, %s44
      %p46 = scmp.eq.s32.totalorder %s45, 0
      %s48 = sadd.s32 %s47, 1
      %s49 = scalar_select %p46, %s47, %s48
      %p52 = pneg %p46
      %p53 = scmp.eq.s32.totalorder %s17, 3
      %p54 = por %p52, %p53
      %p55 = scmp.ne.s32.totalorder %s47, %s50
      %p56 = scmp.eq.s32.totalorder %s17, 0
      %p57 = por %p55, %p56
      %p58 = scmp.ne.s32.totalorder %s47, %s50
      %p59 = scmp.eq.s32.totalorder %s22, 3
      %p60 = por %p58, %p59
      %p61 = scmp.ne.s32.totalorder %s50, %s51
      %p62 = scmp.eq.s32.totalorder %s22, 0
      %p63 = por %p61, %p62
      %p64 = scmp.ne.s32.totalorder %s50, %s51
      %p65 = scmp.eq.s32.totalorder %s23, 3
      %p66 = por %p64, %p65
      %p68 = scmp.ne.s32.totalorder %s51, %s67
      %p69 = scmp.eq.s32.totalorder %s23, 0
      %p70 = por %p68, %p69
      %s71 = smul.u32 %s24, 2
      %s72 = sadd.s32 %s71, %s25
      %p73 = scmp.lt.s32.totalorder %s72, 2
      %s74 = scalar_select %p73, %s72, 2
      %s75 = smul.u32 %s36, 2
      %s76 = sadd.s32 %s75, %s32
      %p77 = scmp.lt.s32.totalorder %s76, 2
      %s78 = scalar_select %p77, %s76, 2
      %s79 = ssub.s32 %s74, %s78
      %p80 = scmp.eq.s32.totalorder %s79, 0
      %s82 = sadd.s32 %s81, 1
      %s83 = scalar_select %p80, %s81, %s82
      %p86 = pneg %p80
      %p87 = scmp.eq.s32.totalorder %s17, 3
      %p88 = por %p86, %p87
      %p89 = scmp.ne.s32.totalorder %s81, %s84
      %p90 = scmp.eq.s32.totalorder %s17, 0
      %p91 = por %p89, %p90
      %p92 = scmp.ne.s32.totalorder %s81, %s84
      %p93 = scmp.eq.s32.totalorder %s22, 3
      %p94 = por %p92, %p93
      %p95 = scmp.ne.s32.totalorder %s84, %s85
      %p96 = scmp.eq.s32.totalorder %s22, 0
      %p97 = por %p95, %p96
      %p98 = scmp.ne.s32.totalorder %s84, %s85
      %p99 = scmp.eq.s32.totalorder %s23, 3
      %p100 = por %p98, %p99
      %p102 = scmp.ne.s32.totalorder %s85, %s101
      %p103 = scmp.eq.s32.totalorder %s23, 0
      %p104 = por %p102, %p103
      %s105 = ssub.s32 %s24, %s36
      %p106 = scmp.eq.s32.totalorder %s105, 0
      %s108 = sadd.s32 %s107, 1
      %s109 = scalar_select %p106, %s107, %s108
      %p112 = pneg %p106
      %p113 = scmp.eq.s32.totalorder %s17, 3
      %p114 = por %p112, %p113
      %p115 = scmp.ne.s32.totalorder %s107, %s110
      %p116 = scmp.eq.s32.totalorder %s17, 0
      %p117 = por %p115, %p116
      %p118 = scmp.ne.s32.totalorder %s107, %s110
      %p119 = scmp.eq.s32.totalorder %s22, 3
      %p120 = por %p118, %p119
      %p121 = scmp.ne.s32.totalorder %s110, %s111
      %p122 = scmp.eq.s32.totalorder %s22, 0
      %p123 = por %p121, %p122
      %p124 = scmp.ne.s32.totalorder %s110, %s111
      %p125 = scmp.eq.s32.totalorder %s23, 3
      %p126 = por %p124, %p125
      %p128 = scmp.ne.s32.totalorder %s111, %s127
      %p129 = scmp.eq.s32.totalorder %s23, 0
      %p130 = por %p128, %p129
      %p131 = scmp.le.s32.totalorder 1, %s17
      %p132 = scmp.lt.s32.totalorder %s17, 5
      %p133 = pnand %p131, %p132
      %p134 = pneg %p133
      // Predicated region
      $region9: #{tpu_custom_call.1} parent=5 // pred_check
        _
      $region10: #{tpu_custom_call.1} parent=5 // pred_check_branch
        %136 = sbr.rel (%p133) target = $region12
      $region11: #{tpu_custom_call.1} parent=5 // pred_region
        %s137 = ssub.s32 %s17, 1
      $region12: #{tpu_custom_call.1} parent=5 // pred_fallthru
        _
      %p138 = scmp.lt.s32.totalorder %s17, 4
      // Predicated region
      $region13: #{tpu_custom_call.1} parent=5 // pred_check
        %p139 = pneg %p138
      $region14: #{tpu_custom_call.1} parent=5 // pred_check_branch
        %141 = sbr.rel (%p139) target = $region16
      $region15: #{tpu_custom_call.1} parent=5 // pred_region
        // Predicated region
        $region17: #{tpu_custom_call.1} parent=15 // pred_check
          %p142 = pneg %p57
        $region18: #{tpu_custom_call.1} parent=15 // pred_check_branch
          %144 = sbr.rel (%p142) target = $region20
        $region19: #{tpu_custom_call.1} parent=15 // pred_region
          %s145 = sand.u32 %s47, 1
          %s146 = scalar_lea.sflag [#allocation3], %s145
          %s147 = sand.u32 %s47, 1
          %s148 = smul.addr %s147, 32
          %s149 = scalar_lea.vmem [#allocation2], %s148
          %s150 = smul.u32 %s24, 2
          %s151 = sadd.s32 %s150, %s25
          %p152 = scmp.lt.s32.totalorder %s151, 2
          %s153 = scalar_select %p152, %s151, 2
          %s154 = smul.u32 2, %s153
          %s155 = ssub.s32 5, %s154
          %p156 = scmp.lt.s32.totalorder %s155, 2
          %s157 = scalar_select %p156, %s155, 2
          %s158 = smul.u32 128, %s157
          %s159 = smul.u32 %s158, 2
          %s161 = ssub.s32 512, %s159
          %162 = vsyncadd %s146, %s161
          %p163 = scmp.ne.s32.totalorder 0, %s159
          %s164 = smul.addr %s154, 2
          %s165 = smul.addr %s164, 128
          %s166 = scalar_lea.hbm %s0, %s165
          %s167 = smul.u32 16, %s157
          %s168 = sshll.u32 %s149, 4
          %s169 = int_to_ptr.vmem [resolvable:$true] %s168
          %s170 = sshll.u32 %s167, 4
          %174 = dma.hbm_to_vmem [thread:$0]  (%p163), %s166, %s170, %s169, %s146, 256, 256, 16
        $region20: #{tpu_custom_call.1} parent=15 // pred_fallthru
          _
        // Predicated region
        $region21: #{tpu_custom_call.1} parent=15 // pred_check
          %p175 = pneg %p91
        $region22: #{tpu_custom_call.1} parent=15 // pred_check_branch
          %177 = sbr.rel (%p175) target = $region24
        $region23: #{tpu_custom_call.1} parent=15 // pred_region
          %s178 = sand.u32 %s81, 1
          %s179 = scalar_lea.sflag [#allocation6], %s178
          %s180 = sand.u32 %s81, 1
          %s181 = smul.addr %s180, 16
          %s182 = scalar_lea.vmem [#allocation5], %s181
          %s183 = smul.u32 %s24, 2
          %s184 = sadd.s32 %s183, %s25
          %p185 = scmp.lt.s32.totalorder %s184, 2
          %s186 = scalar_select %p185, %s184, 2
          %s187 = smul.u32 2, %s186
          %s188 = ssub.s32 5, %s187
          %p189 = scmp.lt.s32.totalorder %s188, 2
          %s190 = scalar_select %p189, %s188, 2
          %s191 = smul.u32 128, %s190
          %s193 = ssub.s32 256, %s191
          %194 = vsyncadd %s179, %s193
          %p195 = scmp.ne.s32.totalorder 0, %s191
          %s196 = smul.addr %s187, 128
          %s197 = scalar_lea.hbm %s1, %s196
          %s198 = smul.u32 8, %s190
          %s199 = sshll.u32 %s182, 4
          %s200 = int_to_ptr.vmem [resolvable:$true] %s199
          %s201 = sshll.u32 %s198, 4
          %205 = dma.hbm_to_vmem [thread:$0]  (%p195), %s197, %s201, %s200, %s179, 128, 128, 8
        $region24: #{tpu_custom_call.1} parent=15 // pred_fallthru
          _
      $region16: #{tpu_custom_call.1} parent=5 // pred_fallthru
        _
      %p206 = scmp.le.s32.totalorder 1, %s17
      %p207 = scmp.lt.s32.totalorder %s17, 5
      %p208 = pnand %p206, %p207
      %p209 = pneg %p208
      // Predicated region
      $region25: #{tpu_custom_call.1} parent=5 // pred_check
        _
      $region26: #{tpu_custom_call.1} parent=5 // pred_check_branch
        %211 = sbr.rel (%p208) target = $region28
      $region27: #{tpu_custom_call.1} parent=5 // pred_region
        %s212 = ssub.s32 %s17, 1
        %s213 = sand.u32 %s50, 1
        %s214 = scalar_lea.sflag [#allocation3], %s213
        %s215 = sand.u32 %s50, 1
        %s216 = smul.addr %s215, 32
        %s217 = scalar_lea.vmem [#allocation2], %s216
        // Predicated region
        $region29: #{tpu_custom_call.1} parent=27 // pred_check
          %p218 = pneg %p63
        $region30: #{tpu_custom_call.1} parent=27 // pred_check_branch
          %220 = sbr.rel (%p218) target = $region32
        $region31: #{tpu_custom_call.1} parent=27 // pred_region
          %221 = dma.done %s214, 512
        $region32: #{tpu_custom_call.1} parent=27 // pred_fallthru
          _
        %s222 = sand.u32 %s84, 1
        %s223 = scalar_lea.sflag [#allocation6], %s222
        %s224 = sand.u32 %s84, 1
        %s225 = smul.addr %s224, 16
        %s226 = scalar_lea.vmem [#allocation5], %s225
        // Predicated region
        $region33: #{tpu_custom_call.1} parent=27 // pred_check
          %p227 = pneg %p97
        $region34: #{tpu_custom_call.1} parent=27 // pred_check_branch
          %229 = sbr.rel (%p227) target = $region36
        $region35: #{tpu_custom_call.1} parent=27 // pred_region
          %230 = dma.done %s223, 256
        $region36: #{tpu_custom_call.1} parent=27 // pred_fallthru
          _
        %s231 = sand.u32 %s50, 1
        %s232 = scalar_lea.sflag [#allocation3], %s231
        %s233 = sand.u32 %s50, 1
        %s234 = smul.addr %s233, 32
        %s235 = scalar_lea.vmem [#allocation2], %s234
        %p236 = pneg %p63
        %p237 = pneg %p60
        %s238 = sand.u32 %s84, 1
        %s239 = scalar_lea.sflag [#allocation6], %s238
        %s240 = sand.u32 %s84, 1
        %s241 = smul.addr %s240, 16
        %s242 = scalar_lea.vmem [#allocation5], %s241
        %p243 = pneg %p97
        %p244 = pneg %p94
        %p245 = pneg %p123
        %p246 = pneg %p120
        %s247 = sand.u32 %s110, 1
        %s248 = scalar_lea.sflag [#allocation4], %s247
        %s249 = sand.u32 %s110, 1
        %s250 = smul.addr %s249, 8
        %s251 = scalar_lea.vmem [#allocation7], %s250
        %s252 = smul.u32 %s26, 2
        %s253 = sadd.s32 %s252, %s27
        %p254 = scmp.lt.s32.totalorder %s253, 2
        %s255 = scalar_select %p254, %s253, 2
        %s256 = smul.u32 2, %s255
        %s257 = ssub.s32 5, %s256
        %p258 = scmp.lt.s32.totalorder %s257, 2
        %s259 = scalar_select %p258, %s257, 2
        %s260 = smul.u32 128, %s259
        %s261 = smul.u32 %s260, 2
        %s262 = smul.u32 %s26, 2
        %s263 = sadd.s32 %s262, %s27
        %p264 = scmp.lt.s32.totalorder %s263, 2
        %s265 = scalar_select %p264, %s263, 2
        %s266 = smul.u32 2, %s265
        %s267 = ssub.s32 5, %s266
        %p268 = scmp.lt.s32.totalorder %s267, 2
        %s269 = scalar_select %p268, %s267, 2
        %s270 = smul.u32 128, %s269
        %p271 = scmp.eq.s32.totalorder %s27, 0
        // Predicated region
        $region37: #{tpu_custom_call.1} parent=27 // pred_check
          %p272 = pneg %p271
        $region38: #{tpu_custom_call.1} parent=27 // pred_check_branch
          %274 = sbr.rel (%p272) target = $region40
        $region39: #{tpu_custom_call.1} parent=27 // pred_region
          %275 = vst [vmem:[%s251] sm:$0xff] 0.0
        $region40: #{tpu_custom_call.1} parent=27 // pred_fallthru
          _
        %v276 = vld [vmem:[%s217] sm:$0xff]
        %v277 = vld [vmem:[%s217 + $0x10] sm:$0xff]
        %v278 = vld [vmem:[%s217 + $0x8] sm:$0xff]
        %v279 = vld [vmem:[%s217 + $0x18] sm:$0xff]
        %v280 = vld [vmem:[%s226] sm:$0xff]
        %v281 = vld [vmem:[%s226 + $0x8] sm:$0xff]
        %v282 = vadd.f32 %v278, 1e-08
        %v283 = vadd.f32 %v279, 1e-08
        %v284 = vlog2.pop %v282
        %v285 = vmul.f32 %v284, 0.6931472
        %v286 = vlog2.pop %v283
        %v287 = vmul.f32 %v286, 0.6931472
        %v288 = vadd.f32 %v280, %v282
        %v289 = vadd.f32 %v281, %v283
        %v290 = vlog2.pop %v288
        %v291 = vmul.f32 %v290, 0.6931472
        %v292 = vlog2.pop %v289
        %v293 = vmul.f32 %v292, 0.6931472
        %vm294 = vcmp.lt.f32.partialorder %v282, 1.0
        %vm295 = vcmp.lt.f32.partialorder %v283, 1.0
        %v296 = vadd.f32 %v282, 1.0
        %v297 = vadd.f32 %v283, 1.0
        %v298 = vsel %vm294, %v296, %v282
        %v299 = vsel %vm295, %v297, %v283
        %v300 = vsub.f32 %v298, 1.0
        %v301 = vsub.f32 %v299, 1.0
        %v302 = vadd.f32 %v300, 1.0
        %v303 = vadd.f32 %v301, 1.0
        %v304 = vadd.f32 %v300, 2.0
        %v305 = vadd.f32 %v301, 2.0
        %v306 = vadd.f32 %v300, 3.0
        %v307 = vadd.f32 %v301, 3.0
        %v308 = vadd.f32 %v300, 4.0
        %v309 = vadd.f32 %v301, 4.0
        %v310 = vadd.f32 %v300, 5.0
        %v311 = vadd.f32 %v301, 5.0
        %v312 = vadd.f32 %v300, 6.0
        %v313 = vadd.f32 %v301, 6.0
        %v314 = vadd.f32 %v300, 7.0
        %v315 = vadd.f32 %v301, 7.0
        %v316 = vadd.f32 %v300, 8.0
        %v317 = vadd.f32 %v301, 8.0
        %v318 = vmul.f32 %v302, %v304
        %v319 = vmul.f32 %v303, %v305
        %v320 = vmul.f32 %v318, %v306
        %v321 = vmul.f32 %v319, %v307
        %v322 = vmul.f32 %v320, %v308
        %v323 = vmul.f32 %v321, %v309
        %v324 = vmul.f32 %v322, %v310
        %v325 = vmul.f32 %v323, %v311
        %v326 = vmul.f32 %v324, %v312
        %v327 = vmul.f32 %v325, %v313
        %v328 = vmul.f32 %v326, %v314
        %v329 = vmul.f32 %v327, %v315
        %v330 = vmul.f32 %v328, %v316
        %v331 = vmul.f32 %v329, %v317
        %v332 = vmul.f32 %v316, %v314
        %v333 = vmul.f32 %v317, %v315
        %v334 = vmul.f32 %v332, %v312
        %v335 = vmul.f32 %v333, %v313
        %v336 = vmul.f32 %v334, %v310
        %v337 = vmul.f32 %v335, %v311
        %v338 = vmul.f32 %v336, %v308
        %v339 = vmul.f32 %v337, %v309
        %v340 = vmul.f32 %v338, %v306
        %v341 = vmul.f32 %v339, %v307
        %v342 = vmul.f32 %v340, %v304
        %v343 = vmul.f32 %v341, %v305
        %v344 = vmul.f32 %v342, 676.5204
        %v345 = vmul.f32 %v343, 676.5204
        %v346 = vadd.f32 %v330, %v344
        %v347 = vadd.f32 %v331, %v345
        %v348 = vmul.f32 %v302, %v340
        %v349 = vmul.f32 %v303, %v341
        %v350 = vmul.f32 %v348, -1259.1392
        %v351 = vmul.f32 %v349, -1259.1392
        %v352 = vadd.f32 %v346, %v350
        %v353 = vadd.f32 %v347, %v351
        %v354 = vmul.f32 %v318, %v338
        %v355 = vmul.f32 %v319, %v339
        %v356 = vmul.f32 %v354, 771.3234
        %v357 = vmul.f32 %v355, 771.3234
        %v358 = vadd.f32 %v352, %v356
        %v359 = vadd.f32 %v353, %v357
        %v360 = vmul.f32 %v320, %v336
        %v361 = vmul.f32 %v321, %v337
        %v362 = vmul.f32 %v360, -176.61504
        %v363 = vmul.f32 %v361, -176.61504
        %v364 = vadd.f32 %v358, %v362
        %v365 = vadd.f32 %v359, %v363
        %v366 = vmul.f32 %v322, %v334
        %v367 = vmul.f32 %v323, %v335
        %v368 = vmul.f32 %v366, 12.507343
        %v369 = vmul.f32 %v367, 12.507343
        %v370 = vadd.f32 %v364, %v368
        %v371 = vadd.f32 %v365, %v369
        %v372 = vmul.f32 %v324, %v332
        %v373 = vmul.f32 %v325, %v333
        %v374 = vmul.f32 %v372, -0.1385711
        %v375 = vmul.f32 %v373, -0.1385711
        %v376 = vadd.f32 %v370, %v374
        %v377 = vadd.f32 %v371, %v375
        %v378 = vmul.f32 %v326, %v316
        %v379 = vmul.f32 %v327, %v317
        %v380 = vmul.f32 %v378, 9.984369e-06
        %v381 = vmul.f32 %v379, 9.984369e-06
        %v382 = vadd.f32 %v376, %v380
        %v383 = vadd.f32 %v377, %v381
        %v384 = vmul.f32 %v328, 1.5056327e-07
        %v385 = vmul.f32 %v329, 1.5056327e-07
        %v386 = vadd.f32 %v382, %v384
        %v387 = vadd.f32 %v383, %v385
        %v388 = vrcp.pop %v330
        %v389 = vmul.f32 %v386, %v388
        %v390 = vrcp.pop %v331
        %v391 = vmul.f32 %v387, %v390
        %v392 = vadd.f32 %v314, 0.5
        %v393 = vadd.f32 %v315, 0.5
        %v394 = vadd.f32 %v300, 0.5
        %v395 = vadd.f32 %v301, 0.5
        %v396 = vlog2.pop %v392
        %v397 = vmul.f32 %v396, 0.6931472
        %v398 = vlog2.pop %v393
        %v399 = vmul.f32 %v398, 0.6931472
        %v400 = vmul.f32 %v394, %v397
        %v401 = vmul.f32 %v395, %v399
        %v402 = vadd.f32 %v400, 0.9189385
        %v403 = vadd.f32 %v401, 0.9189385
        %v404 = vsub.f32 %v402, %v392
        %v405 = vsub.f32 %v403, %v393
        %v406 = vlog2.pop %v389
        %v407 = vmul.f32 %v406, 0.6931472
        %v408 = vlog2.pop %v391
        %v409 = vmul.f32 %v408, 0.6931472
        %v410 = vadd.f32 %v404, %v407
        %v411 = vadd.f32 %v405, %v409
        %v412 = vsub.f32 %v410, %v285
        %v413 = vsub.f32 %v411, %v287
        %v414 = vsel %vm294, %v412, %v410
        %v415 = vsel %vm295, %v413, %v411
        %v416 = vadd.f32 %v280, 1.0
        %v417 = vadd.f32 %v281, 1.0
        %v418 = vsub.f32 %v416, 1.0
        %v419 = vsub.f32 %v417, 1.0
        %v420 = vadd.f32 %v418, 1.0
        %v421 = vadd.f32 %v419, 1.0
        %v422 = vadd.f32 %v418, 2.0
        %v423 = vadd.f32 %v419, 2.0
        %v424 = vadd.f32 %v418, 3.0
        %v425 = vadd.f32 %v419, 3.0
        %v426 = vadd.f32 %v418, 4.0
        %v427 = vadd.f32 %v419, 4.0
        %v428 = vadd.f32 %v418, 5.0
        %v429 = vadd.f32 %v419, 5.0
        %v430 = vadd.f32 %v418, 6.0
        %v431 = vadd.f32 %v419, 6.0
        %v432 = vadd.f32 %v418, 7.0
        %v433 = vadd.f32 %v419, 7.0
        %v434 = vadd.f32 %v418, 8.0
        %v435 = vadd.f32 %v419, 8.0
        %v436 = vmul.f32 %v420, %v422
        %v437 = vmul.f32 %v421, %v423
        %v438 = vmul.f32 %v436, %v424
        %v439 = vmul.f32 %v437, %v425
        %v440 = vmul.f32 %v438, %v426
        %v441 = vmul.f32 %v439, %v427
        %v442 = vmul.f32 %v440, %v428
        %v443 = vmul.f32 %v441, %v429
        %v444 = vmul.f32 %v442, %v430
        %v445 = vmul.f32 %v443, %v431
        %v446 = vmul.f32 %v444, %v432
        %v447 = vmul.f32 %v445, %v433
        %v448 = vmul.f32 %v446, %v434
        %v449 = vmul.f32 %v447, %v435
        %v450 = vmul.f32 %v434, %v432
        %v451 = vmul.f32 %v435, %v433
        %v452 = vmul.f32 %v450, %v430
        %v453 = vmul.f32 %v451, %v431
        %v454 = vmul.f32 %v452, %v428
        %v455 = vmul.f32 %v453, %v429
        %v456 = vmul.f32 %v454, %v426
        %v457 = vmul.f32 %v455, %v427
        %v458 = vmul.f32 %v456, %v424
        %v459 = vmul.f32 %v457, %v425
        %v460 = vmul.f32 %v458, %v422
        %v461 = vmul.f32 %v459, %v423
        %v462 = vmul.f32 %v460, 676.5204
        %v463 = vmul.f32 %v461, 676.5204
        %v464 = vadd.f32 %v448, %v462
        %v465 = vadd.f32 %v449, %v463
        %v466 = vmul.f32 %v420, %v458
        %v467 = vmul.f32 %v421, %v459
        %v468 = vmul.f32 %v466, -1259.1392
        %v469 = vmul.f32 %v467, -1259.1392
        %v470 = vadd.f32 %v464, %v468
        %v471 = vadd.f32 %v465, %v469
        %v472 = vmul.f32 %v436, %v456
        %v473 = vmul.f32 %v437, %v457
        %v474 = vmul.f32 %v472, 771.3234
        %v475 = vmul.f32 %v473, 771.3234
        %v476 = vadd.f32 %v470, %v474
        %v477 = vadd.f32 %v471, %v475
        %v478 = vmul.f32 %v438, %v454
        %v479 = vmul.f32 %v439, %v455
        %v480 = vmul.f32 %v478, -176.61504
        %v481 = vmul.f32 %v479, -176.61504
        %v482 = vadd.f32 %v476, %v480
        %v483 = vadd.f32 %v477, %v481
        %v484 = vmul.f32 %v440, %v452
        %v485 = vmul.f32 %v441, %v453
        %v486 = vmul.f32 %v484, 12.507343
        %v487 = vmul.f32 %v485, 12.507343
        %v488 = vadd.f32 %v482, %v486
        %v489 = vadd.f32 %v483, %v487
        %v490 = vmul.f32 %v442, %v450
        %v491 = vmul.f32 %v443, %v451
        %v492 = vmul.f32 %v490, -0.1385711
        %v493 = vmul.f32 %v491, -0.1385711
        %v494 = vadd.f32 %v488, %v492
        %v495 = vadd.f32 %v489, %v493
        %v496 = vmul.f32 %v444, %v434
        %v497 = vmul.f32 %v445, %v435
        %v498 = vmul.f32 %v496, 9.984369e-06
        %v499 = vmul.f32 %v497, 9.984369e-06
        %v500 = vadd.f32 %v494, %v498
        %v501 = vadd.f32 %v495, %v499
        %v502 = vmul.f32 %v446, 1.5056327e-07
        %v503 = vmul.f32 %v447, 1.5056327e-07
        %v504 = vadd.f32 %v500, %v502
        %v505 = vadd.f32 %v501, %v503
        %v506 = vrcp.pop %v448
        %v507 = vmul.f32 %v504, %v506
        %v508 = vrcp.pop %v449
        %v509 = vmul.f32 %v505, %v508
        %v510 = vadd.f32 %v432, 0.5
        %v511 = vadd.f32 %v433, 0.5
        %v512 = vadd.f32 %v418, 0.5
        %v513 = vadd.f32 %v419, 0.5
        %v514 = vlog2.pop %v510
        %v515 = vmul.f32 %v514, 0.6931472
        %v516 = vlog2.pop %v511
        %v517 = vmul.f32 %v516, 0.6931472
        %v518 = vmul.f32 %v512, %v515
        %v519 = vmul.f32 %v513, %v517
        %v520 = vadd.f32 %v518, 0.9189385
        %v521 = vadd.f32 %v519, 0.9189385
        %v522 = vsub.f32 %v520, %v510
        %v523 = vsub.f32 %v521, %v511
        %v524 = vlog2.pop %v507
        %v525 = vmul.f32 %v524, 0.6931472
        %v526 = vlog2.pop %v509
        %v527 = vmul.f32 %v526, 0.6931472
        %v528 = vadd.f32 %v522, %v525
        %v529 = vadd.f32 %v523, %v527
        %vm530 = vcmp.lt.f32.partialorder %v288, 1.0
        %vm531 = vcmp.lt.f32.partialorder %v289, 1.0
        %v532 = vadd.f32 %v288, 1.0
        %v533 = vadd.f32 %v289, 1.0
        %v534 = vsel %vm530, %v532, %v288
        %v535 = vsel %vm531, %v533, %v289
        %v536 = vsub.f32 %v534, 1.0
        %v537 = vsub.f32 %v535, 1.0
        %v538 = vadd.f32 %v536, 1.0
        %v539 = vadd.f32 %v537, 1.0
        %v540 = vadd.f32 %v536, 2.0
        %v541 = vadd.f32 %v537, 2.0
        %v542 = vadd.f32 %v536, 3.0
        %v543 = vadd.f32 %v537, 3.0
        %v544 = vadd.f32 %v536, 4.0
        %v545 = vadd.f32 %v537, 4.0
        %v546 = vadd.f32 %v536, 5.0
        %v547 = vadd.f32 %v537, 5.0
        %v548 = vadd.f32 %v536, 6.0
        %v549 = vadd.f32 %v537, 6.0
        %v550 = vadd.f32 %v536, 7.0
        %v551 = vadd.f32 %v537, 7.0
        %v552 = vadd.f32 %v536, 8.0
        %v553 = vadd.f32 %v537, 8.0
        %v554 = vmul.f32 %v538, %v540
        %v555 = vmul.f32 %v539, %v541
        %v556 = vmul.f32 %v554, %v542
        %v557 = vmul.f32 %v555, %v543
        %v558 = vmul.f32 %v556, %v544
        %v559 = vmul.f32 %v557, %v545
        %v560 = vmul.f32 %v558, %v546
        %v561 = vmul.f32 %v559, %v547
        %v562 = vmul.f32 %v560, %v548
        %v563 = vmul.f32 %v561, %v549
        %v564 = vmul.f32 %v562, %v550
        %v565 = vmul.f32 %v563, %v551
        %v566 = vmul.f32 %v564, %v552
        %v567 = vmul.f32 %v565, %v553
        %v568 = vmul.f32 %v552, %v550
        %v569 = vmul.f32 %v553, %v551
        %v570 = vmul.f32 %v568, %v548
        %v571 = vmul.f32 %v569, %v549
        %v572 = vmul.f32 %v570, %v546
        %v573 = vmul.f32 %v571, %v547
        %v574 = vmul.f32 %v572, %v544
        %v575 = vmul.f32 %v573, %v545
        %v576 = vmul.f32 %v574, %v542
        %v577 = vmul.f32 %v575, %v543
        %v578 = vmul.f32 %v576, %v540
        %v579 = vmul.f32 %v577, %v541
        %v580 = vmul.f32 %v578, 676.5204
        %v581 = vmul.f32 %v579, 676.5204
        %v582 = vadd.f32 %v566, %v580
        %v583 = vadd.f32 %v567, %v581
        %v584 = vmul.f32 %v538, %v576
        %v585 = vmul.f32 %v539, %v577
        %v586 = vmul.f32 %v584, -1259.1392
        %v587 = vmul.f32 %v585, -1259.1392
        %v588 = vadd.f32 %v582, %v586
        %v589 = vadd.f32 %v583, %v587
        %v590 = vmul.f32 %v554, %v574
        %v591 = vmul.f32 %v555, %v575
        %v592 = vmul.f32 %v590, 771.3234
        %v593 = vmul.f32 %v591, 771.3234
        %v594 = vadd.f32 %v588, %v592
        %v595 = vadd.f32 %v589, %v593
        %v596 = vmul.f32 %v556, %v572
        %v597 = vmul.f32 %v557, %v573
        %v598 = vmul.f32 %v596, -176.61504
        %v599 = vmul.f32 %v597, -176.61504
        %v600 = vadd.f32 %v594, %v598
        %v601 = vadd.f32 %v595, %v599
        %v602 = vmul.f32 %v558, %v570
        %v603 = vmul.f32 %v559, %v571
        %v604 = vmul.f32 %v602, 12.507343
        %v605 = vmul.f32 %v603, 12.507343
        %v606 = vadd.f32 %v600, %v604
        %v607 = vadd.f32 %v601, %v605
        %v608 = vmul.f32 %v560, %v568
        %v609 = vmul.f32 %v561, %v569
        %v610 = vmul.f32 %v608, -0.1385711
        %v611 = vmul.f32 %v609, -0.1385711
        %v612 = vadd.f32 %v606, %v610
        %v613 = vadd.f32 %v607, %v611
        %v614 = vmul.f32 %v562, %v552
        %v615 = vmul.f32 %v563, %v553
        %v616 = vmul.f32 %v614, 9.984369e-06
        %v617 = vmul.f32 %v615, 9.984369e-06
        %v618 = vadd.f32 %v612, %v616
        %v619 = vadd.f32 %v613, %v617
        %v620 = vmul.f32 %v564, 1.5056327e-07
        %v621 = vmul.f32 %v565, 1.5056327e-07
        %v622 = vadd.f32 %v618, %v620
        %v623 = vadd.f32 %v619, %v621
        %v624 = vrcp.pop %v566
        %v625 = vmul.f32 %v622, %v624
        %v626 = vrcp.pop %v567
        %v627 = vmul.f32 %v623, %v626
        %v628 = vadd.f32 %v550, 0.5
        %v629 = vadd.f32 %v551, 0.5
        %v630 = vadd.f32 %v536, 0.5
        %v631 = vadd.f32 %v537, 0.5
        %v632 = vlog2.pop %v628
        %v633 = vmul.f32 %v632, 0.6931472
        %v634 = vlog2.pop %v629
        %v635 = vmul.f32 %v634, 0.6931472
        %v636 = vmul.f32 %v630, %v633
        %v637 = vmul.f32 %v631, %v635
        %v638 = vadd.f32 %v636, 0.9189385
        %v639 = vadd.f32 %v637, 0.9189385
        %v640 = vsub.f32 %v638, %v628
        %v641 = vsub.f32 %v639, %v629
        %v642 = vlog2.pop %v625
        %v643 = vmul.f32 %v642, 0.6931472
        %v644 = vlog2.pop %v627
        %v645 = vmul.f32 %v644, 0.6931472
        %v646 = vadd.f32 %v640, %v643
        %v647 = vadd.f32 %v641, %v645
        %v648 = vsub.f32 %v646, %v291
        %v649 = vsub.f32 %v647, %v293
        %v650 = vsel %vm530, %v648, %v646
        %v651 = vsel %vm531, %v649, %v647
        %v652 = vadd.f32 %v414, %v528
        %v653 = vadd.f32 %v415, %v529
        %v654 = vsub.f32 %v652, %v650
        %v655 = vsub.f32 %v653, %v651
        %v656 = vadd.f32 %v278, %v280
        %v657 = vadd.f32 %v279, %v281
        %v658 = vadd.f32 %v276, %v282
        %v659 = vadd.f32 %v277, %v283
        %v660 = vlog2.pop %v658
        %v661 = vmul.f32 %v660, 0.6931472
        %v662 = vlog2.pop %v659
        %v663 = vmul.f32 %v662, 0.6931472
        %v664 = vsub.f32 %v661, %v285
        %v665 = vsub.f32 %v663, %v287
        %v666 = vmul.f32 %v656, %v664
        %v667 = vmul.f32 %v657, %v665
        %v668 = vadd.f32 %v276, 1e-08
        %v669 = vadd.f32 %v277, 1e-08
        %v670 = vlog2.pop %v668
        %v671 = vmul.f32 %v670, 0.6931472
        %v672 = vlog2.pop %v669
        %v673 = vmul.f32 %v672, 0.6931472
        %v674 = vsub.f32 %v285, %v671
        %v675 = vsub.f32 %v287, %v673
        %v676 = vmul.f32 %v280, %v674
        %v677 = vmul.f32 %v281, %v675
        %v678 = vadd.f32 %v666, %v676
        %v679 = vadd.f32 %v667, %v677
        %v680 = vadd.f32 %v654, %v678
        %v681 = vadd.f32 %v655, %v679
        %vm682 = vcmp.ne.f32.partialorder %v680, %v680
        %vm683 = vcmp.ne.f32.partialorder %v681, %v681
        %v684 = vsel %vm682, inf, %v680
        %v685 = vsel %vm683, inf, %v681
        %s686 = smul.u32 %s26, 2
        %s687 = sadd.s32 %s686, %s27
        %s688 = smul.u32 %s687, 16
        %v689 = vlaneseq
        %v690 = vshrl.u32 %v689, 7
        %v691 = vadd.s32 %v690, 8
        %v692 = vstv %s688
        %v693 = vadd.s32 %v692, %v690
        %v694 = vadd.s32 %v692, %v691
        %vm695 = vcmp.lt.s32.totalorder %v693, 40
        %vm696 = vcmp.lt.s32.totalorder %v694, 40
        %v697 = vsel %vm695, 1, 0
        %v698 = vsel %vm696, 1, 0
        %vm699 = vcmp.eq.s32.totalorder %v697, 1
        %vm700 = vcmp.eq.s32.totalorder %v698, 1
        %v701 = vsel %vm699, %v684, 0.0
        %v702 = vsel %vm700, %v685, 0.0
        %v703 = vadd.f32 %v701, %v702
        %v704 = vld [vmem:[%s251] sm:$0xff]
        %v705 = vadd.f32 %v704, %v703
        %706 = vst [vmem:[%s251] sm:$0xff] %v705
        %s707 = sand.u32 %s110, 1
        %s708 = scalar_lea.sflag [#allocation4], %s707
        %s709 = sand.u32 %s110, 1
        %s710 = smul.addr %s709, 8
        %s711 = scalar_lea.vmem [#allocation7], %s710
        // Predicated region
        $region41: #{tpu_custom_call.1} parent=27 // pred_check
          %p712 = pneg %p120
        $region42: #{tpu_custom_call.1} parent=27 // pred_check_branch
          %714 = sbr.rel (%p712) target = $region44
        $region43: #{tpu_custom_call.1} parent=27 // pred_region
          %s716 = ssub.s32 128, 128
          %717 = vsyncadd %s708, %s716
          %s718 = smul.addr %s26, 128
          %s719 = scalar_lea.hbm %s2, %s718
          %s721 = sshll.u32 %s711, 4
          %s722 = int_to_ptr.vmem [resolvable:$true] %s721
          %724 = dma.vmem_to_hbm [thread:$0]  %s722, 128, %s719, %s708
        $region44: #{tpu_custom_call.1} parent=27 // pred_fallthru
          _
      $region28: #{tpu_custom_call.1} parent=5 // pred_fallthru
        _
      %p725 = scmp.le.s32.totalorder 2, %s17
      // Predicated region
      $region45: #{tpu_custom_call.1} parent=5 // pred_check
        %p726 = pneg %p725
      $region46: #{tpu_custom_call.1} parent=5 // pred_check_branch
        %728 = sbr.rel (%p726) target = $region48
      $region47: #{tpu_custom_call.1} parent=5 // pred_region
        %s729 = ssub.s32 %s17, 2
        // Predicated region
        $region49: #{tpu_custom_call.1} parent=47 // pred_check
          %p730 = pneg %p126
        $region50: #{tpu_custom_call.1} parent=47 // pred_check_branch
          %732 = sbr.rel (%p730) target = $region52
        $region51: #{tpu_custom_call.1} parent=47 // pred_region
          %s733 = sand.u32 %s111, 1
          %s734 = scalar_lea.sflag [#allocation4], %s733
          %s735 = sand.u32 %s111, 1
          %s736 = smul.addr %s735, 8
          %s737 = scalar_lea.vmem [#allocation7], %s736
          %738 = dma.done %s734, 128
        $region52: #{tpu_custom_call.1} parent=47 // pred_fallthru
          _
      $region48: #{tpu_custom_call.1} parent=5 // pred_fallthru
        _
    $region6: #{tpu_custom_call.1} parent=1 // loop_footer
      %s21 = sadd.s32 1, %s17
    $region7: #{tpu_custom_call.1} parent=1 // loop_footer_branch
      %16 = sbr.rel target = $region3
    $region8: #{tpu_custom_call.1} parent=1 // loop_exit
      _
    %739 = vsyncpa [#allocation3], 1
    %s740 = scalar_lea.sflag [#allocation3], 1
    %741 = vsyncpa %s740, 1
    %742 = vsyncpa [#allocation6], 1
    %s743 = scalar_lea.sflag [#allocation6], 1
    %744 = vsyncpa %s743, 1
    %745 = vsyncpa [#allocation4], 1
    %s746 = scalar_lea.sflag [#allocation4], 1
    %747 = vsyncpa %s746, 1

</llo_original>
